<compile_context>
chip_gen: v7x
topology: tpu7x:2x2x1
jax: 0.10.0
libtpu: 0.0.40
codegen_flags: <defaults>
</compile_context>

<pallas_src>
import math

import jax
import jax.numpy as jnp
from jax.experimental import pallas as pl
from jax.experimental.pallas import tpu as pltpu


def _round_up(x, m):
    return ((x + m - 1) // m) * m


def _choose_tile(dim, target, align=128):
    """Return (padded_dim, tile): tile % align == 0, tile divides padded_dim,
    tile <= max(target, align), minimal padding."""
    dp = _round_up(dim, align)
    if dp <= target:
        return dp, dp
    t = max(align, (target // align) * align)
    while t >= align:
        if dp % t == 0:
            return dp, t
        t -= align
    return dp, align  # unreachable (align always divides dp)


def _condconv_matmul_kernel(p_ref, w_ref, o_ref, acc_ref):
    # p_ref  : (1, tm, tk) bf16  -- patches tile for sample b
    # w_ref  : (1, tk, tn) bf16  -- pre-mixed weight tile for sample b
    # o_ref  : (1, tn, tm)       -- output tile, stored transposed (channels, HW)
    # acc_ref: (tm, tn) f32 accumulator, persists across the K grid axis
    k = pl.program_id(3)

    @pl.when(k == 0)
    def _init():
        acc_ref[...] = jnp.zeros_like(acc_ref)

    acc_ref[...] += jnp.dot(p_ref[0], w_ref[0],
                            preferred_element_type=jnp.float32)

    @pl.when(k == pl.num_programs(3) - 1)
    def _store():
        # Fused NHWC->NCHW: write the tile transposed (XLU, epilogue only).
        o_ref[0] = acc_ref[...].T.astype(o_ref.dtype)


def cond_conv2d_forward(x_nchw, routing_weights, expert_weight_flat,
                        out_channels, kernel_size=3, stride=1, dilation=1,
                        tm_target=512, tn_target=256, tk_target=256):
    """CondConv2d forward (groups=1, bias=False, static 'same'-style padding)."""
    B, C, H, W = x_nchw.shape
    kh = kw = kernel_size
    pad = ((stride - 1) + dilation * (kernel_size - 1)) // 2  # timm get_padding

    Hout = (H + 2 * pad - dilation * (kh - 1) - 1) // stride + 1
    Wout = (W + 2 * pad - dilation * (kw - 1) - 1) // stride + 1
    HW = Hout * Wout
    K = kh * kw * C

    # ---- glue: im2col in bf16 (patches ordered (ky, kx, cin) on the K axis) ----
    x_nhwc = jnp.transpose(x_nchw, (0, 2, 3, 1)).astype(jnp.bfloat16)
    xpad = jnp.pad(x_nhwc, ((0, 0), (pad, pad), (pad, pad), (0, 0)))
    cols = []
    for ky in range(kh):
        for kx in range(kw):
            y0 = ky * dilation
            x0 = kx * dilation
            cols.append(
                xpad[:, y0:y0 + Hout * stride:stride,
                     x0:x0 + Wout * stride:stride, :])
    patches = jnp.concatenate(cols, axis=-1).reshape(B, HW, K)

    # ---- glue: expert mixing on the MXU (outside the kernel), f32 then bf16 ----
    # mixed[b] = sum_e routing[b, e] * W_e   -> (B, Cout, Cin, kh, kw)
    mixed = (routing_weights.astype(jnp.float32)
             @ expert_weight_flat.astype(jnp.float32))
    mixed = mixed.reshape(B, out_channels, C, kh, kw)
    # reorder to (B, K, Cout) with K = (ky, kx, cin) to match the patches layout
    mixed = jnp.transpose(mixed, (0, 3, 4, 2, 1)).reshape(B, K, out_channels)
    mixed = mixed.astype(jnp.bfloat16)

    # ---- pad to lane-aligned tiles (zero padding -> contributes zero) ----
    HWp, tm = _choose_tile(HW, tm_target, 128)
    Kp, tk = _choose_tile(K, tk_target, 128)
    Coutp, tn = _choose_tile(out_channels, tn_target, 128)

    patches = jnp.pad(patches, ((0, 0), (0, HWp - HW), (0, Kp - K)))
    mixed = jnp.pad(mixed, ((0, 0), (0, Kp - K), (0, Coutp - out_channels)))

    grid = (B, HWp // tm, Coutp // tn, Kp // tk)

    out_t = pl.pallas_call(
        _condconv_matmul_kernel,
        out_shape=jax.ShapeDtypeStruct((B, Coutp, HWp), x_nchw.dtype),
        grid_spec=pltpu.PrefetchScalarGridSpec(
            num_scalar_prefetch=0,
            grid=grid,
            in_specs=[
                pl.BlockSpec((1, tm, tk), lambda b, m, n, k: (b, m, k)),
                pl.BlockSpec((1, tk, tn), lambda b, m, n, k: (b, k, n)),
            ],
            out_specs=pl.BlockSpec((1, tn, tm), lambda b, m, n, k: (b, n, m)),
            scratch_shapes=[pltpu.VMEM((tm, tn), jnp.float32)],
        ),
        compiler_params=pltpu.CompilerParams(
            dimension_semantics=("parallel", "parallel", "parallel", "arbitrary"),
            # Headroom for larger tile sweeps; actual per-step usage here is <1 MiB.
            vmem_limit_bytes=64 * 1024 * 1024,
        ),
    )(patches, mixed)

    # Output already in (B, Cout, HW) layout (transpose fused into the kernel).
    out = out_t[:, :out_channels, :HW].reshape(B, out_channels, Hout, Wout)
    return out


def _reference_forward(x_nchw, routing_weights, expert_weight_flat,
                       out_channels, kernel_size=3, stride=1, dilation=1):
    """Pure-JAX reference (per-sample conv), mirroring the PyTorch semantics."""
    B, C, H, W = x_nchw.shape
    kh = kw = kernel_size
    pad = ((stride - 1) + dilation * (kernel_size - 1)) // 2
    w = (routing_weights @ expert_weight_flat).reshape(B, out_channels, C, kh, kw)

    def per_sample(xi, wi):
        return jax.lax.conv_general_dilated(
            xi[None], wi, window_strides=(stride, stride),
            padding=((pad, pad), (pad, pad)),
            rhs_dilation=(dilation, dilation),
            dimension_numbers=("NCHW", "OIHW", "NCHW"))[0]

    return jax.vmap(per_sample)(x_nchw, w)


if __name__ == "__main__":
    # Small shapes consistent with the module.
    B, Cin, H, W = 2, 4, 16, 16
    Cout, E, ksize = 8, 4, 3

    key = jax.random.PRNGKey(0)
    kx, kr, kw_ = jax.random.split(key, 3)

    x = jax.random.normal(kx, (B, Cin, H, W), dtype=jnp.float32)
    # Routing weights (CondConv normally sigmoids these; any values work here).
    routing = jax.nn.sigmoid(jax.random.normal(kr, (B, E), dtype=jnp.float32))

    # Deterministic init == kaiming_uniform_(a=sqrt(5)) per expert:
    # bound = 1/sqrt(fan_in), fan_in = Cin*kh*kw.
    fan_in = Cin * ksize * ksize
    bound = 1.0 / math.sqrt(fan_in)
    expert_weight = jax.random.uniform(
        kw_, (E, Cout * Cin * ksize * ksize),
        minval=-bound, maxval=bound, dtype=jnp.float32)

    out = cond_conv2d_forward(x, routing, expert_weight, Cout, kernel_size=ksize)
    out = jax.block_until_ready(out)

    ref = _reference_forward(x, routing, expert_weight, Cout, kernel_size=ksize)
    assert out.shape == (B, Cout, H, W), out.shape
    max_err = float(jnp.max(jnp.abs(out - ref)))
    # bf16 operands with f32 accumulation -> small relative error vs f32 reference.
    assert jnp.allclose(out, ref, atol=2e-2, rtol=2e-2), max_err

    print("KERNEL_OK")
</pallas_src>

<mosaic_0001>
module attributes {stable_mosaic.version = 11 : i64} {
  func.func @_condconv_matmul_kernel(%arg0: i32, %arg1: i32, %arg2: i32, %arg3: i32, %arg4: memref<1x256x128xbf16, #tpu.memory_space<vmem>>, %arg5: memref<1x128x128xbf16, #tpu.memory_space<vmem>>, %arg6: memref<1x128x256xf32, #tpu.memory_space<vmem>>, %arg7: memref<256x128xf32, #tpu.memory_space<vmem>>) attributes {dimension_semantics = [#tpu.dimension_semantics<parallel>, #tpu.dimension_semantics<parallel>, #tpu.dimension_semantics<parallel>, #tpu.dimension_semantics<arbitrary>], iteration_bounds = array<i64: 2, 1, 1, 1>, scalar_prefetch = 0 : i64, scratch_operands = 1 : i64, tpu.core_type = #tpu.core_type<tc>, window_params = [{transform_indices = @transform_0, window_bounds = array<i64: 1, 256, 128>}, {transform_indices = @transform_1, window_bounds = array<i64: 1, 128, 128>}, {transform_indices = @transform_2, window_bounds = array<i64: 1, 128, 256>}]} {
    %c0_i32 = arith.constant 0 : i32
    %0 = arith.cmpi eq, %arg3, %c0_i32 : i32
    %1 = arith.extui %0 : i1 to i32
    %c0_i32_0 = arith.constant 0 : i32
    %2 = arith.cmpi ne, %1, %c0_i32_0 : i32
    scf.if %2 {
      %cst_12 = arith.constant 0.000000e+00 : f32
      %14 = vector.broadcast %cst_12 : f32 to vector<256x128xf32>
      %c0_13 = arith.constant 0 : index
      %c0_14 = arith.constant 0 : index
      %15 = vector.load %arg7[%c0_13, %c0_14] : memref<256x128xf32, #tpu.memory_space<vmem>>, vector<256x128xf32>
      tpu.vector_store %arg7[%c0_13, %c0_14], %14 {strides = array<i32>} : memref<256x128xf32, #tpu.memory_space<vmem>>, vector<256x128xf32>,
    } else {
    }
    %c0 = arith.constant 0 : index
    %c0_1 = arith.constant 0 : index
    %3 = vector.load %arg7[%c0, %c0_1] : memref<256x128xf32, #tpu.memory_space<vmem>>, vector<256x128xf32>
    %c0_2 = arith.constant 0 : index
    %c0_3 = arith.constant 0 : index
    %c0_4 = arith.constant 0 : index
    %4 = vector.load %arg4[%c0_2, %c0_3, %c0_4] : memref<1x256x128xbf16, #tpu.memory_space<vmem>>, vector<1x256x128xbf16>
    %5 = vector.shape_cast %4 : vector<1x256x128xbf16> to vector<256x128xbf16>
    %c0_5 = arith.constant 0 : index
    %c0_6 = arith.constant 0 : index
    %c0_7 = arith.constant 0 : index
    %6 = vector.load %arg5[%c0_5, %c0_6, %c0_7] : memref<1x128x128xbf16, #tpu.memory_space<vmem>>, vector<1x128x128xbf16>
    %7 = vector.shape_cast %6 : vector<1x128x128xbf16> to vector<128x128xbf16>
    %cst = arith.constant dense<0.000000e+00> : vector<256x128xf32>
    %8 = tpu.matmul %5, %7, %cst {dimension_numbers = #tpu.dot_dimension_numbers<[1], [0], [0], [1], [0, 0, 1, 1], [], []>} : vector<256x128xbf16>, vector<128x128xbf16>, vector<256x128xf32> -> vector<256x128xf32>
    %9 = arith.addf %3, %8 : vector<256x128xf32>
    %c0_8 = arith.constant 0 : index
    %c0_9 = arith.constant 0 : index
    %10 = vector.load %arg7[%c0_8, %c0_9] : memref<256x128xf32, #tpu.memory_space<vmem>>, vector<256x128xf32>
    tpu.vector_store %arg7[%c0_8, %c0_9], %9 {strides = array<i32>} : memref<256x128xf32, #tpu.memory_space<vmem>>, vector<256x128xf32>,
    %c0_i32_10 = arith.constant 0 : i32
    %11 = arith.cmpi eq, %arg3, %c0_i32_10 : i32
    %12 = arith.extui %11 : i1 to i32
    %c0_i32_11 = arith.constant 0 : i32
    %13 = arith.cmpi ne, %12, %c0_i32_11 : i32
    scf.if %13 {
      %c0_12 = arith.constant 0 : index
      %c0_13 = arith.constant 0 : index
      %14 = vector.load %arg7[%c0_12, %c0_13] : memref<256x128xf32, #tpu.memory_space<vmem>>, vector<256x128xf32>
      %15 = tpu.transpose %14, [1, 0] : vector<256x128xf32> -> vector<128x256xf32>
      %c0_14 = arith.constant 0 : index
      %c0_15 = arith.constant 0 : index
      %c0_16 = arith.constant 0 : index
      %16 = vector.load %arg6[%c0_14, %c0_15, %c0_16] : memref<1x128x256xf32, #tpu.memory_space<vmem>>, vector<1x128x256xf32>
      %17 = vector.shape_cast %16 : vector<1x128x256xf32> to vector<128x256xf32>
      %18 = vector.shape_cast %15 : vector<128x256xf32> to vector<1x128x256xf32>
      tpu.vector_store %arg6[%c0_14, %c0_15, %c0_16], %18 {strides = array<i32>} : memref<1x128x256xf32, #tpu.memory_space<vmem>>, vector<1x128x256xf32>,
    } else {
    }
    return
  }
  func.func @transform_0(%arg0: i32, %arg1: i32, %arg2: i32, %arg3: i32) -> (i32, i32, i32) {
    %c0_i32 = arith.constant 0 : i32
    return %arg0, %arg1, %arg3 : i32, i32, i32
  }
  func.func @transform_1(%arg0: i32, %arg1: i32, %arg2: i32, %arg3: i32) -> (i32, i32, i32) {
    %c0_i32 = arith.constant 0 : i32
    return %arg0, %arg3, %arg2 : i32, i32, i32
  }
  func.func @transform_2(%arg0: i32, %arg1: i32, %arg2: i32, %arg3: i32) -> (i32, i32, i32) {
    %c0_i32 = arith.constant 0 : i32
    return %arg0, %arg2, %arg1 : i32, i32, i32
  }
}

</mosaic_0001>

<llo_original>
// kernel: tpu_custom_call.1
$region0: #{tpu_custom_call.1}
  #allocation0 [shape = 'u32[]', space=smem, size = 0x4, offset = 0x4, fixed_abs, tag = 'smem constant byte address 0x4 - core index']
  #allocation1 [shape = 'u32[144,128]{1,0:T(1,128)}', space=vmem, size = 0x12000, scoped, tag = 'internal scratch']
  #allocation2 [shape = 'f32[256,128]{1,0:T(8,128)}', space=vmem, size = 0x20000, scoped, tag = 'scratch operand']
  %s0 = inlined_call_operand.hbm [shape: bf16[2,256,128], index: 0, kind: input, shape index: {}]
  %s1 = inlined_call_operand.hbm [shape: bf16[2,128,128], index: 1, kind: input, shape index: {}]
  %s2 = inlined_call_operand.hbm [shape: f32[2,128,256], index: 2, kind: output, shape index: {}]
  %s3 = sld [smem:[#allocation0]]
  $region57: #{tpu_custom_call.1} parent=0
    _
  %s5 = ssub.s32 1, %s3
  %s6 = scalar_select 0, %s5, %s3
  $region1: #{tpu_custom_call.1} parent=0
    #allocation3 [shape = 'u8[131072]{0}', space=vmem, size = 0x20000, scoped, tag = 'input window, operand 0']
    #allocation4 [shape = 's32[2]{0}', space=sflag, size = 0x8, scoped, tag = 'scoped memory for tpu_custom_call.1']
    #allocation5 [shape = 's32[2]{0}', space=sflag, size = 0x8, scoped, tag = 'scoped memory for tpu_custom_call.1']
    #allocation6 [shape = 'u8[65536]{0}', space=vmem, size = 0x10000, scoped, tag = 'input window, operand 1']
    #allocation7 [shape = 's32[2]{0}', space=sflag, size = 0x8, scoped, tag = 'scoped memory for tpu_custom_call.1']
    #allocation8 [shape = 'u8[262144]{0}', space=vmem, size = 0x40000, scoped, tag = 'output window, operand 0']
    %7 = vsyncpa [#allocation4], 0
    %s8 = scalar_lea.sflag [#allocation4], 1
    %9 = vsyncpa %s8, 0
    %10 = vsyncpa [#allocation7], 0
    %s11 = scalar_lea.sflag [#allocation7], 1
    %12 = vsyncpa %s11, 0
    %13 = vsyncpa [#allocation5], 0
    %s14 = scalar_lea.sflag [#allocation5], 1
    %15 = vsyncpa %s14, 0
    loop: start=0, step=1, limit=4
    $region2: #{tpu_custom_call.1} parent=1 // loop_pre_header
      _
    $region3: #{tpu_custom_call.1} parent=1 // loop_header
      %s17 = sphi 0, %s21
      %p18 = scmp.ge.s32.totalorder %s17, 4
      %s24 = sphi 0, %s50
      %s25 = sphi 0, %s46
      %s26 = sphi 0, %s42
      %s27 = sphi 0, %s38
      %s28 = sphi 0, %s24
      %s29 = sphi 0, %s25
      %s30 = sphi 0, %s26
      %s31 = sphi 0, %s27
      %s32 = sphi 0, %s28
      %s33 = sphi 0, %s29
      %s34 = sphi 0, %s30
      %s35 = sphi 0, %s31
      %s57 = sphi 0, %s59
      %s60 = sphi 0, %s57
      %s61 = sphi 0, %s60
      %s77 = sphi 0, %s61
      %s87 = sphi 0, %s89
      %s90 = sphi 0, %s87
      %s91 = sphi 0, %s90
      %s107 = sphi 0, %s91
      %s117 = sphi 0, %s119
      %s120 = sphi 0, %s117
      %s121 = sphi 0, %s120
      %s137 = sphi 0, %s121
    $region4: #{tpu_custom_call.1} parent=1 // loop_header_branch
      %20 = sbr.rel (%p18) target = $region8
    $region5: #{tpu_custom_call.1} parent=1 // loop_body
      %s22 = ssub.s32 %s17, 1
      %s23 = ssub.s32 %s17, 2
      %s36 = sadd.s32 1, %s27
      %p37 = scmp.ge.s32.totalorder %s36, 1
      %s38 = scalar_select %p37, 0, %s36
      %s39 = sadd.s32 1, %s26
      %s40 = scalar_select %p37, %s39, %s26
      %p41 = scmp.ge.s32.totalorder %s40, 1
      %s42 = scalar_select %p41, 0, %s40
      %s43 = sadd.s32 1, %s25
      %s44 = scalar_select %p41, %s43, %s25
      %p45 = scmp.ge.s32.totalorder %s44, 1
      %s46 = scalar_select %p45, 0, %s44
      %s47 = sadd.s32 1, %s24
      %s48 = scalar_select %p45, %s47, %s24
      %p49 = scmp.ge.s32.totalorder %s48, 2
      %s50 = scalar_select %p49, 0, %s48
      %s51 = ssub.s32 %s24, %s50
      %s52 = ssub.s32 %s25, %s46
      %s53 = sor.u32 %s51, %s52
      %s54 = ssub.s32 %s27, %s38
      %s55 = sor.u32 %s53, %s54
      %p56 = scmp.eq.s32.totalorder %s55, 0
      %s58 = sadd.s32 %s57, 1
      %s59 = scalar_select %p56, %s57, %s58
      %p62 = pneg %p56
      %p63 = scmp.eq.s32.totalorder %s17, 1
      %p64 = por %p62, %p63
      %p65 = scmp.ne.s32.totalorder %s57, %s60
      %p66 = scmp.eq.s32.totalorder %s17, 0
      %p67 = por %p65, %p66
      %p68 = scmp.ne.s32.totalorder %s57, %s60
      %p69 = scmp.eq.s32.totalorder %s22, 1
      %p70 = por %p68, %p69
      %p71 = scmp.ne.s32.totalorder %s60, %s61
      %p72 = scmp.eq.s32.totalorder %s22, 0
      %p73 = por %p71, %p72
      %p74 = scmp.ne.s32.totalorder %s60, %s61
      %p75 = scmp.eq.s32.totalorder %s23, 1
      %p76 = por %p74, %p75
      %p78 = scmp.ne.s32.totalorder %s61, %s77
      %p79 = scmp.eq.s32.totalorder %s23, 0
      %p80 = por %p78, %p79
      %s81 = ssub.s32 %s24, %s50
      %s82 = ssub.s32 %s27, %s38
      %s83 = sor.u32 %s81, %s82
      %s84 = ssub.s32 %s26, %s42
      %s85 = sor.u32 %s83, %s84
      %p86 = scmp.eq.s32.totalorder %s85, 0
      %s88 = sadd.s32 %s87, 1
      %s89 = scalar_select %p86, %s87, %s88
      %p92 = pneg %p86
      %p93 = scmp.eq.s32.totalorder %s17, 1
      %p94 = por %p92, %p93
      %p95 = scmp.ne.s32.totalorder %s87, %s90
      %p96 = scmp.eq.s32.totalorder %s17, 0
      %p97 = por %p95, %p96
      %p98 = scmp.ne.s32.totalorder %s87, %s90
      %p99 = scmp.eq.s32.totalorder %s22, 1
      %p100 = por %p98, %p99
      %p101 = scmp.ne.s32.totalorder %s90, %s91
      %p102 = scmp.eq.s32.totalorder %s22, 0
      %p103 = por %p101, %p102
      %p104 = scmp.ne.s32.totalorder %s90, %s91
      %p105 = scmp.eq.s32.totalorder %s23, 1
      %p106 = por %p104, %p105
      %p108 = scmp.ne.s32.totalorder %s91, %s107
      %p109 = scmp.eq.s32.totalorder %s23, 0
      %p110 = por %p108, %p109
      %s111 = ssub.s32 %s24, %s50
      %s112 = ssub.s32 %s26, %s42
      %s113 = sor.u32 %s111, %s112
      %s114 = ssub.s32 %s25, %s46
      %s115 = sor.u32 %s113, %s114
      %p116 = scmp.eq.s32.totalorder %s115, 0
      %s118 = sadd.s32 %s117, 1
      %s119 = scalar_select %p116, %s117, %s118
      %p122 = pneg %p116
      %p123 = scmp.eq.s32.totalorder %s17, 1
      %p124 = por %p122, %p123
      %p125 = scmp.ne.s32.totalorder %s117, %s120
      %p126 = scmp.eq.s32.totalorder %s17, 0
      %p127 = por %p125, %p126
      %p128 = scmp.ne.s32.totalorder %s117, %s120
      %p129 = scmp.eq.s32.totalorder %s22, 1
      %p130 = por %p128, %p129
      %p131 = scmp.ne.s32.totalorder %s120, %s121
      %p132 = scmp.eq.s32.totalorder %s22, 0
      %p133 = por %p131, %p132
      %p134 = scmp.ne.s32.totalorder %s120, %s121
      %p135 = scmp.eq.s32.totalorder %s23, 1
      %p136 = por %p134, %p135
      %p138 = scmp.ne.s32.totalorder %s121, %s137
      %p139 = scmp.eq.s32.totalorder %s23, 0
      %p140 = por %p138, %p139
      %p141 = scmp.le.s32.totalorder 1, %s17
      %p142 = scmp.lt.s32.totalorder %s17, 3
      %p143 = pnand %p141, %p142
      %p144 = pneg %p143
      // Predicated region
      $region9: #{tpu_custom_call.1} parent=5 // pred_check
        _
      $region10: #{tpu_custom_call.1} parent=5 // pred_check_branch
        %146 = sbr.rel (%p143) target = $region12
      $region11: #{tpu_custom_call.1} parent=5 // pred_region
        %s147 = ssub.s32 %s17, 1
      $region12: #{tpu_custom_call.1} parent=5 // pred_fallthru
        _
      %p148 = scmp.lt.s32.totalorder %s17, 2
      // Predicated region
      $region13: #{tpu_custom_call.1} parent=5 // pred_check
        %p149 = pneg %p148
      $region14: #{tpu_custom_call.1} parent=5 // pred_check_branch
        %151 = sbr.rel (%p149) target = $region16
      $region15: #{tpu_custom_call.1} parent=5 // pred_region
        // Predicated region
        $region17: #{tpu_custom_call.1} parent=15 // pred_check
          %p152 = pneg %p67
        $region18: #{tpu_custom_call.1} parent=15 // pred_check_branch
          %154 = sbr.rel (%p152) target = $region20
        $region19: #{tpu_custom_call.1} parent=15 // pred_region
          %s155 = sand.u32 %s57, 1
          %s156 = scalar_lea.sflag [#allocation4], %s155
          %s157 = sand.u32 %s57, 1
          %s158 = smul.addr %s157, 128
          %s159 = scalar_lea.vmem [#allocation3], %s158
          %s160 = smul.u32 32, %s25
          %s162 = ssub.s32 2048, 2048
          %163 = vsyncadd %s156, %s162
          %s164 = sadd.s32 %s27, %s160
          %s165 = smul.addr %s24, 32
          %s166 = sadd.s32 %s164, %s165
          %s167 = smul.addr %s166, 64
          %s168 = scalar_lea.hbm %s0, %s167
          %s169 = sshll.u32 %s159, 4
          %s170 = int_to_ptr.vmem [resolvable:$true] %s169
          %175 = dma.hbm_to_vmem [thread:$0]  %s168, 2048, %s170, %s156, 64, 64, 4
        $region20: #{tpu_custom_call.1} parent=15 // pred_fallthru
          _
        // Predicated region
        $region21: #{tpu_custom_call.1} parent=15 // pred_check
          %p176 = pneg %p97
        $region22: #{tpu_custom_call.1} parent=15 // pred_check_branch
          %178 = sbr.rel (%p176) target = $region24
        $region23: #{tpu_custom_call.1} parent=15 // pred_region
          %s179 = sand.u32 %s87, 1
          %s180 = scalar_lea.sflag [#allocation7], %s179
          %s181 = sand.u32 %s87, 1
          %s182 = smul.addr %s181, 64
          %s183 = scalar_lea.vmem [#allocation6], %s182
          %s184 = smul.u32 16, %s27
          %s186 = ssub.s32 1024, 1024
          %187 = vsyncadd %s180, %s186
          %s188 = sadd.s32 %s26, %s184
          %s189 = smul.addr %s24, 16
          %s190 = sadd.s32 %s188, %s189
          %s191 = smul.addr %s190, 64
          %s192 = scalar_lea.hbm %s1, %s191
          %s193 = sshll.u32 %s183, 4
          %s194 = int_to_ptr.vmem [resolvable:$true] %s193
          %199 = dma.hbm_to_vmem [thread:$0]  %s192, 1024, %s194, %s180, 64, 64, 4
        $region24: #{tpu_custom_call.1} parent=15 // pred_fallthru
          _
      $region16: #{tpu_custom_call.1} parent=5 // pred_fallthru
        _
      %p200 = scmp.le.s32.totalorder 1, %s17
      %p201 = scmp.lt.s32.totalorder %s17, 3
      %p202 = pnand %p200, %p201
      %p203 = pneg %p202
      // Predicated region
      $region25: #{tpu_custom_call.1} parent=5 // pred_check
        _
      $region26: #{tpu_custom_call.1} parent=5 // pred_check_branch
        %205 = sbr.rel (%p202) target = $region28
      $region27: #{tpu_custom_call.1} parent=5 // pred_region
        %s206 = ssub.s32 %s17, 1
        %s207 = sand.u32 %s60, 1
        %s208 = scalar_lea.sflag [#allocation4], %s207
        %s209 = sand.u32 %s60, 1
        %s210 = smul.addr %s209, 128
        %s211 = scalar_lea.vmem [#allocation3], %s210
        // Predicated region
        $region29: #{tpu_custom_call.1} parent=27 // pred_check
          %p212 = pneg %p73
        $region30: #{tpu_custom_call.1} parent=27 // pred_check_branch
          %214 = sbr.rel (%p212) target = $region32
        $region31: #{tpu_custom_call.1} parent=27 // pred_region
          %215 = dma.done %s208, 2048
        $region32: #{tpu_custom_call.1} parent=27 // pred_fallthru
          _
        %s216 = sand.u32 %s90, 1
        %s217 = scalar_lea.sflag [#allocation7], %s216
        %s218 = sand.u32 %s90, 1
        %s219 = smul.addr %s218, 64
        %s220 = scalar_lea.vmem [#allocation6], %s219
        // Predicated region
        $region33: #{tpu_custom_call.1} parent=27 // pred_check
          %p221 = pneg %p103
        $region34: #{tpu_custom_call.1} parent=27 // pred_check_branch
          %223 = sbr.rel (%p221) target = $region36
        $region35: #{tpu_custom_call.1} parent=27 // pred_region
          %224 = dma.done %s217, 1024
        $region36: #{tpu_custom_call.1} parent=27 // pred_fallthru
          _
        %s225 = sand.u32 %s60, 1
        %s226 = scalar_lea.sflag [#allocation4], %s225
        %s227 = sand.u32 %s60, 1
        %s228 = smul.addr %s227, 128
        %s229 = scalar_lea.vmem [#allocation3], %s228
        %p230 = pneg %p73
        %p231 = pneg %p70
        %s232 = sand.u32 %s90, 1
        %s233 = scalar_lea.sflag [#allocation7], %s232
        %s234 = sand.u32 %s90, 1
        %s235 = smul.addr %s234, 64
        %s236 = scalar_lea.vmem [#allocation6], %s235
        %p237 = pneg %p103
        %p238 = pneg %p100
        %p239 = pneg %p133
        %p240 = pneg %p130
        %s241 = sand.u32 %s120, 1
        %s242 = scalar_lea.sflag [#allocation5], %s241
        %s243 = sand.u32 %s120, 1
        %s244 = smul.addr %s243, 256
        %s245 = scalar_lea.vmem [#allocation8], %s244
        %s246 = smul.u32 32, %s29
        %s247 = smul.u32 16, %s31
        %s248 = smul.u32 16, %s30
        %s249 = smul.u32 2, %s29
        %p251 = scmp.eq.s32.totalorder %s31, 0
        // Predicated region
        $region37: #{tpu_custom_call.1} parent=27 // pred_check
          %p252 = pneg %p251
        $region38: #{tpu_custom_call.1} parent=27 // pred_check_branch
          %254 = sbr.rel (%p252) target = $region40
        $region39: #{tpu_custom_call.1} parent=27 // pred_region
          %255 = vst [vmem:[#allocation2] sm:$0xff] 0.0
          %256 = vst [vmem:[#allocation2 + $0x8] sm:$0xff] 0.0
          %257 = vst [vmem:[#allocation2 + $0x10] sm:$0xff] 0.0
          %258 = vst [vmem:[#allocation2 + $0x18] sm:$0xff] 0.0
          %259 = vst [vmem:[#allocation2 + $0x20] sm:$0xff] 0.0
          %260 = vst [vmem:[#allocation2 + $0x28] sm:$0xff] 0.0
          %261 = vst [vmem:[#allocation2 + $0x30] sm:$0xff] 0.0
          %262 = vst [vmem:[#allocation2 + $0x38] sm:$0xff] 0.0
          %263 = vst [vmem:[#allocation2 + $0x40] sm:$0xff] 0.0
          %264 = vst [vmem:[#allocation2 + $0x48] sm:$0xff] 0.0
          %265 = vst [vmem:[#allocation2 + $0x50] sm:$0xff] 0.0
          %266 = vst [vmem:[#allocation2 + $0x58] sm:$0xff] 0.0
          %267 = vst [vmem:[#allocation2 + $0x60] sm:$0xff] 0.0
          %268 = vst [vmem:[#allocation2 + $0x68] sm:$0xff] 0.0
          %269 = vst [vmem:[#allocation2 + $0x70] sm:$0xff] 0.0
          %270 = vst [vmem:[#allocation2 + $0x78] sm:$0xff] 0.0
          %271 = vst [vmem:[#allocation2 + $0x80] sm:$0xff] 0.0
          %272 = vst [vmem:[#allocation2 + $0x88] sm:$0xff] 0.0
          %273 = vst [vmem:[#allocation2 + $0x90] sm:$0xff] 0.0
          %274 = vst [vmem:[#allocation2 + $0x98] sm:$0xff] 0.0
          %275 = vst [vmem:[#allocation2 + $0xa0] sm:$0xff] 0.0
          %276 = vst [vmem:[#allocation2 + $0xa8] sm:$0xff] 0.0
          %277 = vst [vmem:[#allocation2 + $0xb0] sm:$0xff] 0.0
          %278 = vst [vmem:[#allocation2 + $0xb8] sm:$0xff] 0.0
          %279 = vst [vmem:[#allocation2 + $0xc0] sm:$0xff] 0.0
          %280 = vst [vmem:[#allocation2 + $0xc8] sm:$0xff] 0.0
          %281 = vst [vmem:[#allocation2 + $0xd0] sm:$0xff] 0.0
          %282 = vst [vmem:[#allocation2 + $0xd8] sm:$0xff] 0.0
          %283 = vst [vmem:[#allocation2 + $0xe0] sm:$0xff] 0.0
          %284 = vst [vmem:[#allocation2 + $0xe8] sm:$0xff] 0.0
          %285 = vst [vmem:[#allocation2 + $0xf0] sm:$0xff] 0.0
          %286 = vst [vmem:[#allocation2 + $0xf8] sm:$0xff] 0.0
        $region40: #{tpu_custom_call.1} parent=27 // pred_fallthru
          _
        %v287 = vld [vmem:[#allocation2] sm:$0xff]
        %v288 = vld [vmem:[#allocation2 + $0x8] sm:$0xff]
        %v289 = vld [vmem:[#allocation2 + $0x10] sm:$0xff]
        %v290 = vld [vmem:[#allocation2 + $0x18] sm:$0xff]
        %v291 = vld [vmem:[#allocation2 + $0x20] sm:$0xff]
        %v292 = vld [vmem:[#allocation2 + $0x28] sm:$0xff]
        %v293 = vld [vmem:[#allocation2 + $0x30] sm:$0xff]
        %v294 = vld [vmem:[#allocation2 + $0x38] sm:$0xff]
        %v295 = vld [vmem:[#allocation2 + $0x40] sm:$0xff]
        %v296 = vld [vmem:[#allocation2 + $0x48] sm:$0xff]
        %v297 = vld [vmem:[#allocation2 + $0x50] sm:$0xff]
        %v298 = vld [vmem:[#allocation2 + $0x58] sm:$0xff]
        %v299 = vld [vmem:[#allocation2 + $0x60] sm:$0xff]
        %v300 = vld [vmem:[#allocation2 + $0x68] sm:$0xff]
        %v301 = vld [vmem:[#allocation2 + $0x70] sm:$0xff]
        %v302 = vld [vmem:[#allocation2 + $0x78] sm:$0xff]
        %v303 = vld [vmem:[#allocation2 + $0x80] sm:$0xff]
        %v304 = vld [vmem:[#allocation2 + $0x88] sm:$0xff]
        %v305 = vld [vmem:[#allocation2 + $0x90] sm:$0xff]
        %v306 = vld [vmem:[#allocation2 + $0x98] sm:$0xff]
        %v307 = vld [vmem:[#allocation2 + $0xa0] sm:$0xff]
        %v308 = vld [vmem:[#allocation2 + $0xa8] sm:$0xff]
        %v309 = vld [vmem:[#allocation2 + $0xb0] sm:$0xff]
        %v310 = vld [vmem:[#allocation2 + $0xb8] sm:$0xff]
        %v311 = vld [vmem:[#allocation2 + $0xc0] sm:$0xff]
        %v312 = vld [vmem:[#allocation2 + $0xc8] sm:$0xff]
        %v313 = vld [vmem:[#allocation2 + $0xd0] sm:$0xff]
        %v314 = vld [vmem:[#allocation2 + $0xd8] sm:$0xff]
        %v315 = vld [vmem:[#allocation2 + $0xe0] sm:$0xff]
        %v316 = vld [vmem:[#allocation2 + $0xe8] sm:$0xff]
        %v317 = vld [vmem:[#allocation2 + $0xf0] sm:$0xff]
        %v318 = vld [vmem:[#allocation2 + $0xf8] sm:$0xff]
        %v319 = vld [vmem:[%s211] sm:$0xf]
        %v320 = vld [vmem:[%s211 + $0x4] sm:$0xf]
        %v321 = vld [vmem:[%s211 + $0x8] sm:$0xf]
        %v322 = vld [vmem:[%s211 + $0xc] sm:$0xf]
        %v323 = vld [vmem:[%s211 + $0x10] sm:$0xf]
        %v324 = vld [vmem:[%s211 + $0x14] sm:$0xf]
        %v325 = vld [vmem:[%s211 + $0x18] sm:$0xf]
        %v326 = vld [vmem:[%s211 + $0x1c] sm:$0xf]
        %v327 = vld [vmem:[%s211 + $0x20] sm:$0xf]
        %v328 = vld [vmem:[%s211 + $0x24] sm:$0xf]
        %v329 = vld [vmem:[%s211 + $0x28] sm:$0xf]
        %v330 = vld [vmem:[%s211 + $0x2c] sm:$0xf]
        %v331 = vld [vmem:[%s211 + $0x30] sm:$0xf]
        %v332 = vld [vmem:[%s211 + $0x34] sm:$0xf]
        %v333 = vld [vmem:[%s211 + $0x38] sm:$0xf]
        %v334 = vld [vmem:[%s211 + $0x3c] sm:$0xf]
        %v335 = vld [vmem:[%s211 + $0x40] sm:$0xf]
        %v336 = vld [vmem:[%s211 + $0x44] sm:$0xf]
        %v337 = vld [vmem:[%s211 + $0x48] sm:$0xf]
        %v338 = vld [vmem:[%s211 + $0x4c] sm:$0xf]
        %v339 = vld [vmem:[%s211 + $0x50] sm:$0xf]
        %v340 = vld [vmem:[%s211 + $0x54] sm:$0xf]
        %v341 = vld [vmem:[%s211 + $0x58] sm:$0xf]
        %v342 = vld [vmem:[%s211 + $0x5c] sm:$0xf]
        %v343 = vld [vmem:[%s211 + $0x60] sm:$0xf]
        %v344 = vld [vmem:[%s211 + $0x64] sm:$0xf]
        %v345 = vld [vmem:[%s211 + $0x68] sm:$0xf]
        %v346 = vld [vmem:[%s211 + $0x6c] sm:$0xf]
        %v347 = vld [vmem:[%s211 + $0x70] sm:$0xf]
        %v348 = vld [vmem:[%s211 + $0x74] sm:$0xf]
        %v349 = vld [vmem:[%s211 + $0x78] sm:$0xf]
        %v350 = vld [vmem:[%s211 + $0x7c] sm:$0xf]
        %v351 = vld [vmem:[%s220] sm:$0xf]
        %v352 = vld [vmem:[%s220 + $0x4] sm:$0xf]
        %v353 = vld [vmem:[%s220 + $0x8] sm:$0xf]
        %v354 = vld [vmem:[%s220 + $0xc] sm:$0xf]
        %v355 = vld [vmem:[%s220 + $0x10] sm:$0xf]
        %v356 = vld [vmem:[%s220 + $0x14] sm:$0xf]
        %v357 = vld [vmem:[%s220 + $0x18] sm:$0xf]
        %v358 = vld [vmem:[%s220 + $0x1c] sm:$0xf]
        %v359 = vld [vmem:[%s220 + $0x20] sm:$0xf]
        %v360 = vld [vmem:[%s220 + $0x24] sm:$0xf]
        %v361 = vld [vmem:[%s220 + $0x28] sm:$0xf]
        %v362 = vld [vmem:[%s220 + $0x2c] sm:$0xf]
        %v363 = vld [vmem:[%s220 + $0x30] sm:$0xf]
        %v364 = vld [vmem:[%s220 + $0x34] sm:$0xf]
        %v365 = vld [vmem:[%s220 + $0x38] sm:$0xf]
        %v366 = vld [vmem:[%s220 + $0x3c] sm:$0xf]
        %v399 = vunpack.c.l.b16 %v319
        %v400 = vunpack.c.l.b16 %v320
        %v401 = vunpack.c.l.b16 %v321
        %v402 = vunpack.c.l.b16 %v322
        %v403 = vunpack.c.l.b16 %v323
        %v404 = vunpack.c.l.b16 %v324
        %v405 = vunpack.c.l.b16 %v325
        %v406 = vunpack.c.l.b16 %v326
        %v407 = vunpack.c.l.b16 %v327
        %v408 = vunpack.c.l.b16 %v328
        %v409 = vunpack.c.l.b16 %v329
        %v410 = vunpack.c.l.b16 %v330
        %v411 = vunpack.c.l.b16 %v331
        %v412 = vunpack.c.l.b16 %v332
        %v413 = vunpack.c.l.b16 %v333
        %v414 = vunpack.c.l.b16 %v334
        %v415 = vunpack.c.l.b16 %v335
        %v416 = vunpack.c.l.b16 %v336
        %v417 = vunpack.c.l.b16 %v337
        %v418 = vunpack.c.l.b16 %v338
        %v419 = vunpack.c.l.b16 %v339
        %v420 = vunpack.c.l.b16 %v340
        %v421 = vunpack.c.l.b16 %v341
        %v422 = vunpack.c.l.b16 %v342
        %v423 = vunpack.c.l.b16 %v343
        %v424 = vunpack.c.l.b16 %v344
        %v425 = vunpack.c.l.b16 %v345
        %v426 = vunpack.c.l.b16 %v346
        %v427 = vunpack.c.l.b16 %v347
        %v428 = vunpack.c.l.b16 %v348
        %v429 = vunpack.c.l.b16 %v349
        %v430 = vunpack.c.l.b16 %v350
        %v431 = vpack.c.b16 %v400, %v399
        %v432 = vpack.c.b16 %v402, %v401
        %v433 = vpack.c.b16 %v404, %v403
        %v434 = vpack.c.b16 %v406, %v405
        %v435 = vpack.c.b16 %v408, %v407
        %v436 = vpack.c.b16 %v410, %v409
        %v437 = vpack.c.b16 %v412, %v411
        %v438 = vpack.c.b16 %v414, %v413
        %v439 = vpack.c.b16 %v416, %v415
        %v440 = vpack.c.b16 %v418, %v417
        %v441 = vpack.c.b16 %v420, %v419
        %v442 = vpack.c.b16 %v422, %v421
        %v443 = vpack.c.b16 %v424, %v423
        %v444 = vpack.c.b16 %v426, %v425
        %v445 = vpack.c.b16 %v428, %v427
        %v446 = vpack.c.b16 %v430, %v429
        %v479 = vunpack.c.l.b16 %v351
        %v480 = vunpack.c.l.b16 %v352
        %v481 = vunpack.c.l.b16 %v353
        %v482 = vunpack.c.l.b16 %v354
        %v483 = vunpack.c.l.b16 %v355
        %v484 = vunpack.c.l.b16 %v356
        %v485 = vunpack.c.l.b16 %v357
        %v486 = vunpack.c.l.b16 %v358
        %v487 = vunpack.c.l.b16 %v359
        %v488 = vunpack.c.l.b16 %v360
        %v489 = vunpack.c.l.b16 %v361
        %v490 = vunpack.c.l.b16 %v362
        %v491 = vunpack.c.l.b16 %v363
        %v492 = vunpack.c.l.b16 %v364
        %v493 = vunpack.c.l.b16 %v365
        %v494 = vunpack.c.l.b16 %v366
        %v495 = vpack.c.b16 %v480, %v479
        %v496 = vpack.c.b16 %v482, %v481
        %v497 = vpack.c.b16 %v484, %v483
        %v498 = vpack.c.b16 %v486, %v485
        %v499 = vpack.c.b16 %v488, %v487
        %v500 = vpack.c.b16 %v490, %v489
        %v501 = vpack.c.b16 %v492, %v491
        %v502 = vpack.c.b16 %v494, %v493
        %511 = vmatprep.subr.bf16.mxu0 0
        %512 = vmatpush1.bf16.msra.mxu0 %v495
        %513 = vmatprep.subr.bf16.mxu0 0
        %514 = vmatpush1.bf16.msra.mxu0 %v496
        %515 = vmatprep.subr.bf16.mxu0 0
        %516 = vmatpush1.bf16.msra.mxu0 %v497
        %517 = vmatprep.subr.bf16.mxu0 0
        %518 = vmatpush1.bf16.msra.mxu0 %v498
        %519 = vmatprep.subr.bf16.mxu0 0
        %520 = vmatpush1.bf16.msra.mxu0 %v499
        %521 = vmatprep.subr.bf16.mxu0 0
        %522 = vmatpush1.bf16.msra.mxu0 %v500
        %523 = vmatprep.subr.bf16.mxu0 0
        %524 = vmatpush1.bf16.msra.mxu0 %v501
        %525 = vmatprep.subr.bf16.mxu0 0
        %526 = vmatpush1.bf16.msra.mxu0 %v502
        %527 = vmatprep.subr.bf16.mxu0 0
        %528 = vmatpush1.bf16.msra.mxu0 0
        %529 = vmatprep.subr.bf16.mxu0 0
        %530 = vmatpush1.bf16.msra.mxu0 0
        %531 = vmatprep.subr.bf16.mxu0 0
        %532 = vmatpush1.bf16.msra.mxu0 0
        %533 = vmatprep.subr.bf16.mxu0 0
        %534 = vmatpush1.bf16.msra.mxu0 0
        %535 = vmatprep.subr.bf16.mxu0 0
        %536 = vmatpush1.bf16.msra.mxu0 0
        %537 = vmatprep.subr.bf16.mxu0 0
        %538 = vmatpush1.bf16.msra.mxu0 0
        %539 = vmatprep.subr.bf16.mxu0 0
        %540 = vmatpush1.bf16.msra.mxu0 0
        %541 = vmatprep.subr.bf16.mxu0 0
        %542 = vmatpush1.bf16.msra.mxu0 0
        %543 = vmatprep.mubr.bf16.mxu0 0
        %544 = vmatmul.mubr.bf16.gmra.mrb[0].mxu0 %v431
        %v545 = vpop.f32.mrb[0].mxu0
        %v546 = vadd.f32 0.0, %v545
        %v547 = vpop.f32.mrb[0].mxu0
        %v548 = vpop.f32.mrb[0].mxu0
        %v549 = vadd.f32 0.0, %v548
        %v550 = vpop.f32.mrb[0].mxu0
        %551 = vmatprep.mubr.bf16.mxu0 0
        %552 = vmatmul.mubr.bf16.gmra.mrb[0].mxu0 %v432
        %v553 = vpop.f32.mrb[0].mxu0
        %v554 = vadd.f32 0.0, %v553
        %v555 = vpop.f32.mrb[0].mxu0
        %v556 = vpop.f32.mrb[0].mxu0
        %v557 = vadd.f32 0.0, %v556
        %v558 = vpop.f32.mrb[0].mxu0
        %559 = vmatprep.mubr.bf16.mxu0 0
        %560 = vmatmul.mubr.bf16.gmra.mrb[0].mxu0 %v433
        %v561 = vpop.f32.mrb[0].mxu0
        %v562 = vadd.f32 0.0, %v561
        %v563 = vpop.f32.mrb[0].mxu0
        %v564 = vpop.f32.mrb[0].mxu0
        %v565 = vadd.f32 0.0, %v564
        %v566 = vpop.f32.mrb[0].mxu0
        %567 = vmatprep.mubr.bf16.mxu0 0
        %568 = vmatmul.mubr.bf16.gmra.mrb[0].mxu0 %v434
        %v569 = vpop.f32.mrb[0].mxu0
        %v570 = vadd.f32 0.0, %v569
        %v571 = vpop.f32.mrb[0].mxu0
        %v572 = vpop.f32.mrb[0].mxu0
        %v573 = vadd.f32 0.0, %v572
        %v574 = vpop.f32.mrb[0].mxu0
        %575 = vmatprep.mubr.bf16.mxu0 0
        %576 = vmatmul.mubr.bf16.gmra.mrb[0].mxu0 %v435
        %v577 = vpop.f32.mrb[0].mxu0
        %v578 = vadd.f32 0.0, %v577
        %v579 = vpop.f32.mrb[0].mxu0
        %v580 = vpop.f32.mrb[0].mxu0
        %v581 = vadd.f32 0.0, %v580
        %v582 = vpop.f32.mrb[0].mxu0
        %583 = vmatprep.mubr.bf16.mxu0 0
        %584 = vmatmul.mubr.bf16.gmra.mrb[0].mxu0 %v436
        %v585 = vpop.f32.mrb[0].mxu0
        %v586 = vadd.f32 0.0, %v585
        %v587 = vpop.f32.mrb[0].mxu0
        %v588 = vpop.f32.mrb[0].mxu0
        %v589 = vadd.f32 0.0, %v588
        %v590 = vpop.f32.mrb[0].mxu0
        %591 = vmatprep.mubr.bf16.mxu0 0
        %592 = vmatmul.mubr.bf16.gmra.mrb[0].mxu0 %v437
        %v593 = vpop.f32.mrb[0].mxu0
        %v594 = vadd.f32 0.0, %v593
        %v595 = vpop.f32.mrb[0].mxu0
        %v596 = vpop.f32.mrb[0].mxu0
        %v597 = vadd.f32 0.0, %v596
        %v598 = vpop.f32.mrb[0].mxu0
        %599 = vmatprep.mubr.bf16.mxu0 0
        %600 = vmatmul.mubr.bf16.gmra.mrb[0].mxu0 %v438
        %v601 = vpop.f32.mrb[0].mxu0
        %v602 = vadd.f32 0.0, %v601
        %v603 = vpop.f32.mrb[0].mxu0
        %v604 = vpop.f32.mrb[0].mxu0
        %v605 = vadd.f32 0.0, %v604
        %v606 = vpop.f32.mrb[0].mxu0
        %607 = vmatprep.mubr.bf16.mxu0 0
        %608 = vmatmul.mubr.bf16.gmra.mrb[0].mxu0 %v439
        %v609 = vpop.f32.mrb[0].mxu0
        %v610 = vadd.f32 0.0, %v609
        %v611 = vpop.f32.mrb[0].mxu0
        %v612 = vpop.f32.mrb[0].mxu0
        %v613 = vadd.f32 0.0, %v612
        %v614 = vpop.f32.mrb[0].mxu0
        %615 = vmatprep.mubr.bf16.mxu0 0
        %616 = vmatmul.mubr.bf16.gmra.mrb[0].mxu0 %v440
        %v617 = vpop.f32.mrb[0].mxu0
        %v618 = vadd.f32 0.0, %v617
        %v619 = vpop.f32.mrb[0].mxu0
        %v620 = vpop.f32.mrb[0].mxu0
        %v621 = vadd.f32 0.0, %v620
        %v622 = vpop.f32.mrb[0].mxu0
        %623 = vmatprep.mubr.bf16.mxu0 0
        %624 = vmatmul.mubr.bf16.gmra.mrb[0].mxu0 %v441
        %v625 = vpop.f32.mrb[0].mxu0
        %v626 = vadd.f32 0.0, %v625
        %v627 = vpop.f32.mrb[0].mxu0
        %v628 = vpop.f32.mrb[0].mxu0
        %v629 = vadd.f32 0.0, %v628
        %v630 = vpop.f32.mrb[0].mxu0
        %631 = vmatprep.mubr.bf16.mxu0 0
        %632 = vmatmul.mubr.bf16.gmra.mrb[0].mxu0 %v442
        %v633 = vpop.f32.mrb[0].mxu0
        %v634 = vadd.f32 0.0, %v633
        %v635 = vpop.f32.mrb[0].mxu0
        %v636 = vpop.f32.mrb[0].mxu0
        %v637 = vadd.f32 0.0, %v636
        %v638 = vpop.f32.mrb[0].mxu0
        %639 = vmatprep.mubr.bf16.mxu0 0
        %640 = vmatmul.mubr.bf16.gmra.mrb[0].mxu0 %v443
        %v641 = vpop.f32.mrb[0].mxu0
        %v642 = vadd.f32 0.0, %v641
        %v643 = vpop.f32.mrb[0].mxu0
        %v644 = vpop.f32.mrb[0].mxu0
        %v645 = vadd.f32 0.0, %v644
        %v646 = vpop.f32.mrb[0].mxu0
        %647 = vmatprep.mubr.bf16.mxu0 0
        %648 = vmatmul.mubr.bf16.gmra.mrb[0].mxu0 %v444
        %v649 = vpop.f32.mrb[0].mxu0
        %v650 = vadd.f32 0.0, %v649
        %v651 = vpop.f32.mrb[0].mxu0
        %v652 = vpop.f32.mrb[0].mxu0
        %v653 = vadd.f32 0.0, %v652
        %v654 = vpop.f32.mrb[0].mxu0
        %655 = vmatprep.mubr.bf16.mxu0 0
        %656 = vmatmul.mubr.bf16.gmra.mrb[0].mxu0 %v445
        %v657 = vpop.f32.mrb[0].mxu0
        %v658 = vadd.f32 0.0, %v657
        %v659 = vpop.f32.mrb[0].mxu0
        %v660 = vpop.f32.mrb[0].mxu0
        %v661 = vadd.f32 0.0, %v660
        %v662 = vpop.f32.mrb[0].mxu0
        %663 = vmatprep.mubr.bf16.mxu0 0
        %664 = vmatmul.mubr.bf16.gmra.mrb[0].mxu0 %v446
        %v665 = vpop.f32.mrb[0].mxu0
        %v666 = vadd.f32 0.0, %v665
        %v667 = vpop.f32.mrb[0].mxu0
        %v668 = vpop.f32.mrb[0].mxu0
        %v669 = vadd.f32 0.0, %v668
        %v670 = vpop.f32.mrb[0].mxu0
        %671 = vdwg.mxu0
        %v672 = vadd.f32 %v287, %v546
        %v673 = vadd.f32 %v288, %v549
        %v674 = vadd.f32 %v289, %v554
        %v675 = vadd.f32 %v290, %v557
        %v676 = vadd.f32 %v291, %v562
        %v677 = vadd.f32 %v292, %v565
        %v678 = vadd.f32 %v293, %v570
        %v679 = vadd.f32 %v294, %v573
        %v680 = vadd.f32 %v295, %v578
        %v681 = vadd.f32 %v296, %v581
        %v682 = vadd.f32 %v297, %v586
        %v683 = vadd.f32 %v298, %v589
        %v684 = vadd.f32 %v299, %v594
        %v685 = vadd.f32 %v300, %v597
        %v686 = vadd.f32 %v301, %v602
        %v687 = vadd.f32 %v302, %v605
        %v688 = vadd.f32 %v303, %v610
        %v689 = vadd.f32 %v304, %v613
        %v690 = vadd.f32 %v305, %v618
        %v691 = vadd.f32 %v306, %v621
        %v692 = vadd.f32 %v307, %v626
        %v693 = vadd.f32 %v308, %v629
        %v694 = vadd.f32 %v309, %v634
        %v695 = vadd.f32 %v310, %v637
        %v696 = vadd.f32 %v311, %v642
        %v697 = vadd.f32 %v312, %v645
        %v698 = vadd.f32 %v313, %v650
        %v699 = vadd.f32 %v314, %v653
        %v700 = vadd.f32 %v315, %v658
        %v701 = vadd.f32 %v316, %v661
        %v702 = vadd.f32 %v317, %v666
        %v703 = vadd.f32 %v318, %v669
        %704 = vst [vmem:[#allocation2] sm:$0xff] %v672
        %705 = vst [vmem:[#allocation2 + $0x8] sm:$0xff] %v673
        %706 = vst [vmem:[#allocation2 + $0x10] sm:$0xff] %v674
        %707 = vst [vmem:[#allocation2 + $0x18] sm:$0xff] %v675
        %708 = vst [vmem:[#allocation2 + $0x20] sm:$0xff] %v676
        %709 = vst [vmem:[#allocation2 + $0x28] sm:$0xff] %v677
        %710 = vst [vmem:[#allocation2 + $0x30] sm:$0xff] %v678
        %711 = vst [vmem:[#allocation2 + $0x38] sm:$0xff] %v679
        %712 = vst [vmem:[#allocation2 + $0x40] sm:$0xff] %v680
        %713 = vst [vmem:[#allocation2 + $0x48] sm:$0xff] %v681
        %714 = vst [vmem:[#allocation2 + $0x50] sm:$0xff] %v682
        %715 = vst [vmem:[#allocation2 + $0x58] sm:$0xff] %v683
        %716 = vst [vmem:[#allocation2 + $0x60] sm:$0xff] %v684
        %717 = vst [vmem:[#allocation2 + $0x68] sm:$0xff] %v685
        %718 = vst [vmem:[#allocation2 + $0x70] sm:$0xff] %v686
        %719 = vst [vmem:[#allocation2 + $0x78] sm:$0xff] %v687
        %720 = vst [vmem:[#allocation2 + $0x80] sm:$0xff] %v688
        %721 = vst [vmem:[#allocation2 + $0x88] sm:$0xff] %v689
        %722 = vst [vmem:[#allocation2 + $0x90] sm:$0xff] %v690
        %723 = vst [vmem:[#allocation2 + $0x98] sm:$0xff] %v691
        %724 = vst [vmem:[#allocation2 + $0xa0] sm:$0xff] %v692
        %725 = vst [vmem:[#allocation2 + $0xa8] sm:$0xff] %v693
        %726 = vst [vmem:[#allocation2 + $0xb0] sm:$0xff] %v694
        %727 = vst [vmem:[#allocation2 + $0xb8] sm:$0xff] %v695
        %728 = vst [vmem:[#allocation2 + $0xc0] sm:$0xff] %v696
        %729 = vst [vmem:[#allocation2 + $0xc8] sm:$0xff] %v697
        %730 = vst [vmem:[#allocation2 + $0xd0] sm:$0xff] %v698
        %731 = vst [vmem:[#allocation2 + $0xd8] sm:$0xff] %v699
        %732 = vst [vmem:[#allocation2 + $0xe0] sm:$0xff] %v700
        %733 = vst [vmem:[#allocation2 + $0xe8] sm:$0xff] %v701
        %734 = vst [vmem:[#allocation2 + $0xf0] sm:$0xff] %v702
        %735 = vst [vmem:[#allocation2 + $0xf8] sm:$0xff] %v703
        // Predicated region
        $region41: #{tpu_custom_call.1} parent=27 // pred_check
          %p736 = pneg %p251
        $region42: #{tpu_custom_call.1} parent=27 // pred_check_branch
          %738 = sbr.rel (%p736) target = $region44
        $region43: #{tpu_custom_call.1} parent=27 // pred_region
          %v739 = vld [vmem:[#allocation2] sm:$0xff]
          %v740 = vld [vmem:[#allocation2 + $0x8] sm:$0xff]
          %v741 = vld [vmem:[#allocation2 + $0x10] sm:$0xff]
          %v742 = vld [vmem:[#allocation2 + $0x18] sm:$0xff]
          %v743 = vld [vmem:[#allocation2 + $0x20] sm:$0xff]
          %v744 = vld [vmem:[#allocation2 + $0x28] sm:$0xff]
          %v745 = vld [vmem:[#allocation2 + $0x30] sm:$0xff]
          %v746 = vld [vmem:[#allocation2 + $0x38] sm:$0xff]
          %v747 = vld [vmem:[#allocation2 + $0x40] sm:$0xff]
          %v748 = vld [vmem:[#allocation2 + $0x48] sm:$0xff]
          %v749 = vld [vmem:[#allocation2 + $0x50] sm:$0xff]
          %v750 = vld [vmem:[#allocation2 + $0x58] sm:$0xff]
          %v751 = vld [vmem:[#allocation2 + $0x60] sm:$0xff]
          %v752 = vld [vmem:[#allocation2 + $0x68] sm:$0xff]
          %v753 = vld [vmem:[#allocation2 + $0x70] sm:$0xff]
          %v754 = vld [vmem:[#allocation2 + $0x78] sm:$0xff]
          %v755 = vld [vmem:[#allocation2 + $0x80] sm:$0xff]
          %v756 = vld [vmem:[#allocation2 + $0x88] sm:$0xff]
          %v757 = vld [vmem:[#allocation2 + $0x90] sm:$0xff]
          %v758 = vld [vmem:[#allocation2 + $0x98] sm:$0xff]
          %v759 = vld [vmem:[#allocation2 + $0xa0] sm:$0xff]
          %v760 = vld [vmem:[#allocation2 + $0xa8] sm:$0xff]
          %v761 = vld [vmem:[#allocation2 + $0xb0] sm:$0xff]
          %v762 = vld [vmem:[#allocation2 + $0xb8] sm:$0xff]
          %v763 = vld [vmem:[#allocation2 + $0xc0] sm:$0xff]
          %v764 = vld [vmem:[#allocation2 + $0xc8] sm:$0xff]
          %v765 = vld [vmem:[#allocation2 + $0xd0] sm:$0xff]
          %v766 = vld [vmem:[#allocation2 + $0xd8] sm:$0xff]
          %v767 = vld [vmem:[#allocation2 + $0xe0] sm:$0xff]
          %v768 = vld [vmem:[#allocation2 + $0xe8] sm:$0xff]
          %v769 = vld [vmem:[#allocation2 + $0xf0] sm:$0xff]
          %v770 = vld [vmem:[#allocation2 + $0xf8] sm:$0xff]
          %771 = vxpose.xlu0.b32.start [1/16] %v739, 128
          %772 = vxpose.xlu0.b32.cont [2/16] %v740, 128
          %773 = vxpose.xlu0.b32.cont [3/16] %v741, 128
          %774 = vxpose.xlu0.b32.cont [4/16] %v742, 128
          %775 = vxpose.xlu0.b32.cont [5/16] %v743, 128
          %776 = vxpose.xlu0.b32.cont [6/16] %v744, 128
          %777 = vxpose.xlu0.b32.cont [7/16] %v745, 128
          %778 = vxpose.xlu0.b32.cont [8/16] %v746, 128
          %779 = vxpose.xlu0.b32.cont [9/16] %v747, 128
          %780 = vxpose.xlu0.b32.cont [10/16] %v748, 128
          %781 = vxpose.xlu0.b32.cont [11/16] %v749, 128
          %782 = vxpose.xlu0.b32.cont [12/16] %v750, 128
          %783 = vxpose.xlu0.b32.cont [13/16] %v751, 128
          %784 = vxpose.xlu0.b32.cont [14/16] %v752, 128
          %785 = vxpose.xlu0.b32.cont [15/16] %v753, 128
          %786 = vxpose.xlu0.b32.end [16/16] %v754, 128
          %v787 = vpop.trf.xlu0
          %v788 = vpop.trf.xlu0
          %v789 = vpop.trf.xlu0
          %v790 = vpop.trf.xlu0
          %v791 = vpop.trf.xlu0
          %v792 = vpop.trf.xlu0
          %v793 = vpop.trf.xlu0
          %v794 = vpop.trf.xlu0
          %v795 = vpop.trf.xlu0
          %v796 = vpop.trf.xlu0
          %v797 = vpop.trf.xlu0
          %v798 = vpop.trf.xlu0
          %v799 = vpop.trf.xlu0
          %v800 = vpop.trf.xlu0
          %v801 = vpop.trf.xlu0
          %v802 = vpop.trf.xlu0
          %803 = vxpose.xlu0.b32.start [1/16] %v755, 128
          %804 = vxpose.xlu0.b32.cont [2/16] %v756, 128
          %805 = vxpose.xlu0.b32.cont [3/16] %v757, 128
          %806 = vxpose.xlu0.b32.cont [4/16] %v758, 128
          %807 = vxpose.xlu0.b32.cont [5/16] %v759, 128
          %808 = vxpose.xlu0.b32.cont [6/16] %v760, 128
          %809 = vxpose.xlu0.b32.cont [7/16] %v761, 128
          %810 = vxpose.xlu0.b32.cont [8/16] %v762, 128
          %811 = vxpose.xlu0.b32.cont [9/16] %v763, 128
          %812 = vxpose.xlu0.b32.cont [10/16] %v764, 128
          %813 = vxpose.xlu0.b32.cont [11/16] %v765, 128
          %814 = vxpose.xlu0.b32.cont [12/16] %v766, 128
          %815 = vxpose.xlu0.b32.cont [13/16] %v767, 128
          %816 = vxpose.xlu0.b32.cont [14/16] %v768, 128
          %817 = vxpose.xlu0.b32.cont [15/16] %v769, 128
          %818 = vxpose.xlu0.b32.end [16/16] %v770, 128
          %v819 = vpop.trf.xlu0
          %v820 = vpop.trf.xlu0
          %v821 = vpop.trf.xlu0
          %v822 = vpop.trf.xlu0
          %v823 = vpop.trf.xlu0
          %v824 = vpop.trf.xlu0
          %v825 = vpop.trf.xlu0
          %v826 = vpop.trf.xlu0
          %v827 = vpop.trf.xlu0
          %v828 = vpop.trf.xlu0
          %v829 = vpop.trf.xlu0
          %v830 = vpop.trf.xlu0
          %v831 = vpop.trf.xlu0
          %v832 = vpop.trf.xlu0
          %v833 = vpop.trf.xlu0
          %v834 = vpop.trf.xlu0
          %835 = vst [vmem:[%s245] sm:$0xff] %v787
          %836 = vst [vmem:[%s245 + $0x8] sm:$0xff] %v819
          %837 = vst [vmem:[%s245 + $0x10] sm:$0xff] %v788
          %838 = vst [vmem:[%s245 + $0x18] sm:$0xff] %v820
          %839 = vst [vmem:[%s245 + $0x20] sm:$0xff] %v789
          %840 = vst [vmem:[%s245 + $0x28] sm:$0xff] %v821
          %841 = vst [vmem:[%s245 + $0x30] sm:$0xff] %v790
          %842 = vst [vmem:[%s245 + $0x38] sm:$0xff] %v822
          %843 = vst [vmem:[%s245 + $0x40] sm:$0xff] %v791
          %844 = vst [vmem:[%s245 + $0x48] sm:$0xff] %v823
          %845 = vst [vmem:[%s245 + $0x50] sm:$0xff] %v792
          %846 = vst [vmem:[%s245 + $0x58] sm:$0xff] %v824
          %847 = vst [vmem:[%s245 + $0x60] sm:$0xff] %v793
          %848 = vst [vmem:[%s245 + $0x68] sm:$0xff] %v825
          %849 = vst [vmem:[%s245 + $0x70] sm:$0xff] %v794
          %850 = vst [vmem:[%s245 + $0x78] sm:$0xff] %v826
          %851 = vst [vmem:[%s245 + $0x80] sm:$0xff] %v795
          %852 = vst [vmem:[%s245 + $0x88] sm:$0xff] %v827
          %853 = vst [vmem:[%s245 + $0x90] sm:$0xff] %v796
          %854 = vst [vmem:[%s245 + $0x98] sm:$0xff] %v828
          %855 = vst [vmem:[%s245 + $0xa0] sm:$0xff] %v797
          %856 = vst [vmem:[%s245 + $0xa8] sm:$0xff] %v829
          %857 = vst [vmem:[%s245 + $0xb0] sm:$0xff] %v798
          %858 = vst [vmem:[%s245 + $0xb8] sm:$0xff] %v830
          %859 = vst [vmem:[%s245 + $0xc0] sm:$0xff] %v799
          %860 = vst [vmem:[%s245 + $0xc8] sm:$0xff] %v831
          %861 = vst [vmem:[%s245 + $0xd0] sm:$0xff] %v800
          %862 = vst [vmem:[%s245 + $0xd8] sm:$0xff] %v832
          %863 = vst [vmem:[%s245 + $0xe0] sm:$0xff] %v801
          %864 = vst [vmem:[%s245 + $0xe8] sm:$0xff] %v833
          %865 = vst [vmem:[%s245 + $0xf0] sm:$0xff] %v802
          %866 = vst [vmem:[%s245 + $0xf8] sm:$0xff] %v834
        $region44: #{tpu_custom_call.1} parent=27 // pred_fallthru
          _
        %s867 = sand.u32 %s120, 1
        %s868 = scalar_lea.sflag [#allocation5], %s867
        %s869 = sand.u32 %s120, 1
        %s870 = smul.addr %s869, 256
        %s871 = scalar_lea.vmem [#allocation8], %s870
        // Predicated region
        $region45: #{tpu_custom_call.1} parent=27 // pred_check
          %p872 = pneg %p130
        $region46: #{tpu_custom_call.1} parent=27 // pred_check_branch
          %874 = sbr.rel (%p872) target = $region48
        $region47: #{tpu_custom_call.1} parent=27 // pred_region
          %s875 = smul.u32 16, %s30
          %s876 = smul.u32 2, %s29
          %s878 = ssub.s32 4096, 4096
          %879 = vsyncadd %s868, %s878
          %s880 = smul.addr %s875, 2
          %s881 = sadd.s32 %s876, %s880
          %s882 = smul.addr %s28, 32
          %s883 = sadd.s32 %s881, %s882
          %s884 = smul.addr %s883, 128
          %s885 = scalar_lea.hbm %s2, %s884
          %s886 = sshll.u32 %s871, 4
          %s887 = int_to_ptr.vmem [resolvable:$true] %s886
          %892 = dma.vmem_to_hbm [thread:$0]  %s887, 4096, %s885, %s868, 256, 256, 16
        $region48: #{tpu_custom_call.1} parent=27 // pred_fallthru
          _
      $region28: #{tpu_custom_call.1} parent=5 // pred_fallthru
        _
      %p893 = scmp.le.s32.totalorder 2, %s17
      // Predicated region
      $region49: #{tpu_custom_call.1} parent=5 // pred_check
        %p894 = pneg %p893
      $region50: #{tpu_custom_call.1} parent=5 // pred_check_branch
        %896 = sbr.rel (%p894) target = $region52
      $region51: #{tpu_custom_call.1} parent=5 // pred_region
        %s897 = ssub.s32 %s17, 2
        // Predicated region
        $region53: #{tpu_custom_call.1} parent=51 // pred_check
          %p898 = pneg %p136
        $region54: #{tpu_custom_call.1} parent=51 // pred_check_branch
          %900 = sbr.rel (%p898) target = $region56
        $region55: #{tpu_custom_call.1} parent=51 // pred_region
          %s901 = sand.u32 %s121, 1
          %s902 = scalar_lea.sflag [#allocation5], %s901
          %s903 = sand.u32 %s121, 1
          %s904 = smul.addr %s903, 256
          %s905 = scalar_lea.vmem [#allocation8], %s904
          %906 = dma.done %s902, 4096
        $region56: #{tpu_custom_call.1} parent=51 // pred_fallthru
          _
      $region52: #{tpu_custom_call.1} parent=5 // pred_fallthru
        _
    $region6: #{tpu_custom_call.1} parent=1 // loop_footer
      %s21 = sadd.s32 1, %s17
    $region7: #{tpu_custom_call.1} parent=1 // loop_footer_branch
      %16 = sbr.rel target = $region3
    $region8: #{tpu_custom_call.1} parent=1 // loop_exit
      _
    %907 = vsyncpa [#allocation4], 1
    %s908 = scalar_lea.sflag [#allocation4], 1
    %909 = vsyncpa %s908, 1
    %910 = vsyncpa [#allocation7], 1
    %s911 = scalar_lea.sflag [#allocation7], 1
    %912 = vsyncpa %s911, 1
    %913 = vsyncpa [#allocation5], 1
    %s914 = scalar_lea.sflag [#allocation5], 1
    %915 = vsyncpa %s914, 1

</llo_original>
